<compile_context>
chip_gen: v7x
topology: tpu7x:2x2x1
jax: 0.10.0
libtpu: 0.0.40
codegen_flags: <defaults>
</compile_context>

<pallas_src>
import jax
import jax.numpy as jnp
from jax.experimental import pallas as pl
from jax.experimental.pallas import tpu as pltpu


def _spatial_se_kernel(w_ref, b_ref, x_ref, o_ref):
    # w_ref: VMEM (1, C, 1) f32  -- 1x1 conv weights (C -> 1)
    # b_ref: SMEM (1,)      f32  -- conv bias
    # x_ref: VMEM (b_blk, C, T)  -- lane-dense spatial tile(s), T = tile of H*W
    # o_ref: VMEM (b_blk, C, T)
    x = x_ref[...]                                          # native dtype

    # Spatial squeeze: channel reduction with f32 accumulation
    # (w is f32, so the product promotes to f32 lane-wise; XLU sublane reduce).
    s = jnp.sum(x * w_ref[...], axis=1, keepdims=True)      # (b_blk, 1, T) f32
    gate = jax.nn.sigmoid(s + b_ref[0])                     # (b_blk, 1, T) f32

    # Channel excitation in the input dtype (no f32 copy of x).
    o_ref[...] = (x * gate.astype(x.dtype)).astype(o_ref.dtype)


def _gen_params():
    """Generation-aware (target block bytes, vmem_limit_bytes)."""
    cap = 128 << 20
    try:
        info = pltpu.get_tpu_info()
        cap = getattr(info, "vmem_capacity_bytes", cap) or cap
    except Exception:
        pass
    if cap <= (64 << 20):
        # v7x: 64 MiB physical VMEM, 3.2 TB/s HBM.  Budget for 2 in-bufs +
        # 2 out-bufs + the block-sized f32 temp from x*w (2x bytes for bf16).
        return 4 << 20, 48 << 20
    # v5e/v6e: 128 MiB physical VMEM -> allow bigger blocks / scoped limit.
    return 6 << 20, 64 << 20


def _pick_blocks(B, C, HW, itemsize, target_bytes):
    """Choose (b_blk, t_hw) for block shape (b_blk, C, t_hw)."""
    slab = C * HW * itemsize                   # one batch element's (C, HW) slab
    if slab < target_bytes:
        # Small per-batch slab: take the full spatial extent and fold batch
        # elements into the block so each pipeline step has real work.
        b_blk = max(1, min(B, target_bytes // max(1, slab)))
        while B % b_blk:                       # keep the grid exact / balanced
            b_blk -= 1
        return b_blk, HW
    # Large slab: tile the spatial axis with balanced, 128-multiple tiles.
    target_lanes = max(128, (target_bytes // max(1, C * itemsize)) // 128 * 128)
    if HW <= target_lanes:
        return 1, HW                           # full-extent block dim is legal
    n_t = pl.cdiv(HW, target_lanes)
    t_hw = pl.cdiv(pl.cdiv(HW, n_t), 128) * 128
    return 1, t_hw
    # TODO(synk): chunk the channel axis inside the kernel when C alone is so
    # large that a (1, C, 128) block exceeds the VMEM budget.


def spatial_se_layer(x, weight, bias, few_shot_weights=None, *, tile_hw=None):
    """x: (B, C, H, W); weight: (C,); bias: (1,). Returns (B, C, H, W)."""
    B, C, H, W = x.shape
    HW = H * W
    itemsize = jnp.dtype(x.dtype).itemsize

    if few_shot_weights is not None:
        # forward(input, weights) branch: mean over dim 0, conv without bias.
        weight = jnp.mean(few_shot_weights, axis=0).reshape(C)
        bias = jnp.zeros((1,), jnp.float32)

    target_bytes, vmem_limit = _gen_params()
    if tile_hw is not None:
        b_blk, t_hw = 1, tile_hw
    else:
        b_blk, t_hw = _pick_blocks(B, C, HW, itemsize, target_bytes)
    n_b = pl.cdiv(B, b_blk)
    n_t = pl.cdiv(HW, t_hw)

    x2 = x.reshape(B, C, HW)                           # free, contiguous reshape
    w2 = weight.astype(jnp.float32).reshape(1, C, 1)   # broadcasts against block
    b2 = bias.astype(jnp.float32).reshape(1)           # SMEM scalar

    out2 = pl.pallas_call(
        _spatial_se_kernel,
        out_shape=jax.ShapeDtypeStruct((B, C, HW), x.dtype),
        grid_spec=pl.GridSpec(
            grid=(n_b, n_t),
            in_specs=[
                pl.BlockSpec((1, C, 1), lambda b, t: (0, 0, 0)),         # weight
                pl.BlockSpec(memory_space=pltpu.SMEM),                   # bias
                pl.BlockSpec((b_blk, C, t_hw), lambda b, t: (b, 0, t)),  # x
            ],
            out_specs=pl.BlockSpec((b_blk, C, t_hw), lambda b, t: (b, 0, t)),
        ),
        compiler_params=pltpu.CompilerParams(
            dimension_semantics=("parallel", "parallel"),
            vmem_limit_bytes=vmem_limit,
        ),
        cost_estimate=pl.CostEstimate(
            flops=3 * B * C * HW,
            transcendentals=B * HW,
            bytes_accessed=2 * B * C * HW * itemsize,
        ),
    )(w2, b2, x2)

    return out2.reshape(B, C, H, W)


def _reference(x, weight, bias):
    # Pure-JAX reference of the PyTorch forward (weights=None branch).
    s = (x * weight[None, :, None, None]).sum(axis=1) + bias[0]
    gate = jax.nn.sigmoid(s)[:, None, :, :]
    return x * gate


if __name__ == "__main__":
    key = jax.random.PRNGKey(0)
    kx, kw, kb, kx2, kx3 = jax.random.split(key, 5)

    # Deterministic synthetic parameters for Conv2d(C, 1, kernel_size=1):
    # PyTorch shapes: weight (1, C, 1, 1) -> flattened to (C,), bias (1,).
    B, C, H, W = 2, 4, 16, 16
    fan_in = C  # 1x1 kernel
    bound = 1.0 / jnp.sqrt(fan_in)
    weight = jax.random.uniform(kw, (C,), minval=-bound, maxval=bound,
                                dtype=jnp.float32)
    bias = jax.random.uniform(kb, (1,), minval=-bound, maxval=bound,
                              dtype=jnp.float32)

    # Test 1: small shape -> batch-folded block (b_blk, C, HW), single step.
    x = jax.random.normal(kx, (B, C, H, W), dtype=jnp.float32)
    y = jax.block_until_ready(spatial_se_layer(x, weight, bias))
    y_ref = _reference(x, weight, bias)
    assert y.shape == (B, C, H, W)
    assert jnp.allclose(y, y_ref, atol=1e-5, rtol=1e-5), "mismatch (test 1)"

    # Test 2: larger spatial extent with an explicit 128-lane tile so the
    # multi-tile (grid over spatial axis) path is exercised.
    H2 = W2 = 32
    x2 = jax.random.normal(kx2, (B, C, H2, W2), dtype=jnp.float32)
    y2 = jax.block_until_ready(spatial_se_layer(x2, weight, bias, tile_hw=128))
    y2_ref = _reference(x2, weight, bias)
    assert y2.shape == (B, C, H2, W2)
    assert jnp.allclose(y2, y2_ref, atol=1e-5, rtol=1e-5), "mismatch (test 2)"

    # Test 3: HW < 128 (e.g. late-stage SE block) with odd batch -> exercises
    # the small-spatial batch-folding path with full-extent lane dim.
    x3 = jax.random.normal(kx3, (3, C, 8, 8), dtype=jnp.float32)
    y3 = jax.block_until_ready(spatial_se_layer(x3, weight, bias))
    y3_ref = _reference(x3, weight, bias)
    assert y3.shape == (3, C, 8, 8)
    assert jnp.allclose(y3, y3_ref, atol=1e-5, rtol=1e-5), "mismatch (test 3)"

    print("KERNEL_OK")
</pallas_src>

<mosaic_0001>
module attributes {stable_mosaic.version = 11 : i64} {
  func.func @_spatial_se_kernel(%arg0: i32, %arg1: i32, %arg2: memref<1x4x1xf32, #tpu.memory_space<vmem>>, %arg3: memref<1xf32, #tpu.memory_space<smem>>, %arg4: memref<2x4x256xf32, #tpu.memory_space<vmem>>, %arg5: memref<2x4x256xf32, #tpu.memory_space<vmem>>) attributes {dimension_semantics = [#tpu.dimension_semantics<parallel>, #tpu.dimension_semantics<parallel>], iteration_bounds = array<i64: 1, 1>, scalar_prefetch = 0 : i64, scratch_operands = 0 : i64, tpu.core_type = #tpu.core_type<tc>, window_params = [{pipeline_mode = #tpu.pipeline_mode<synchronous>, transform_indices = @transform_0, window_bounds = array<i64: 1, 4, 1>}, {transform_indices = @transform_1, window_bounds = array<i64: 1>}, {transform_indices = @transform_2, window_bounds = array<i64: 2, 4, 256>}, {transform_indices = @transform_3, window_bounds = array<i64: 2, 4, 256>}]} {
    %c0 = arith.constant 0 : index
    %c0_0 = arith.constant 0 : index
    %c0_1 = arith.constant 0 : index
    %0 = vector.load %arg4[%c0, %c0_0, %c0_1] : memref<2x4x256xf32, #tpu.memory_space<vmem>>, vector<2x4x256xf32>
    %c0_2 = arith.constant 0 : index
    %c0_3 = arith.constant 0 : index
    %c0_4 = arith.constant 0 : index
    %1 = vector.load %arg2[%c0_2, %c0_3, %c0_4] : memref<1x4x1xf32, #tpu.memory_space<vmem>>, vector<1x4x1xf32>
    %2 = vector.broadcast %1 : vector<1x4x1xf32> to vector<2x4x256xf32>
    %3 = arith.mulf %0, %2 : vector<2x4x256xf32>
    %cst = arith.constant dense<0.000000e+00> : vector<2x256xf32>
    %4 = vector.multi_reduction <add>, %3, %cst [1] : vector<2x4x256xf32> to vector<2x256xf32>
    %5 = vector.shape_cast %4 : vector<2x256xf32> to vector<2x1x256xf32>
    %c0_5 = arith.constant 0 : index
    %6 = memref.load %arg3[%c0_5] : memref<1xf32, #tpu.memory_space<smem>>
    %7 = vector.broadcast %6 : f32 to vector<2x1x256xf32>
    %8 = arith.addf %5, %7 : vector<2x1x256xf32>
    %9 = arith.negf %8 : vector<2x1x256xf32>
    %10 = math.exp %9 : vector<2x1x256xf32>
    %cst_6 = arith.constant 1.000000e+00 : f32
    %11 = vector.broadcast %cst_6 : f32 to vector<2x1x256xf32>
    %12 = arith.addf %11, %10 : vector<2x1x256xf32>
    %13 = arith.divf %11, %12 : vector<2x1x256xf32>
    %14 = vector.broadcast %13 : vector<2x1x256xf32> to vector<2x4x256xf32>
    %15 = arith.mulf %0, %14 : vector<2x4x256xf32>
    %c0_7 = arith.constant 0 : index
    %c0_8 = arith.constant 0 : index
    %c0_9 = arith.constant 0 : index
    %16 = vector.load %arg5[%c0_7, %c0_8, %c0_9] : memref<2x4x256xf32, #tpu.memory_space<vmem>>, vector<2x4x256xf32>
    tpu.vector_store %arg5[%c0_7, %c0_8, %c0_9], %15 {strides = array<i32>} : memref<2x4x256xf32, #tpu.memory_space<vmem>>, vector<2x4x256xf32>,
    return
  }
  func.func @transform_0(%arg0: i32, %arg1: i32) -> (i32, i32, i32) {
    %c0_i32 = arith.constant 0 : i32
    %c0_i32_0 = arith.constant 0 : i32
    %c0_i32_1 = arith.constant 0 : i32
    %c0_i32_2 = arith.constant 0 : i32
    return %c0_i32, %c0_i32_0, %c0_i32_1 : i32, i32, i32
  }
  func.func @transform_1(%arg0: i32, %arg1: i32) -> i32 {
    %c0_i32 = arith.constant 0 : i32
    %c0_i32_0 = arith.constant 0 : i32
    return %c0_i32 : i32
  }
  func.func @transform_2(%arg0: i32, %arg1: i32) -> (i32, i32, i32) {
    %c0_i32 = arith.constant 0 : i32
    %c0_i32_0 = arith.constant 0 : i32
    return %arg0, %c0_i32, %arg1 : i32, i32, i32
  }
  func.func @transform_3(%arg0: i32, %arg1: i32) -> (i32, i32, i32) {
    %c0_i32 = arith.constant 0 : i32
    %c0_i32_0 = arith.constant 0 : i32
    return %arg0, %c0_i32, %arg1 : i32, i32, i32
  }
}

</mosaic_0001>

<llo_original>
// kernel: tpu_custom_call.1
$region0: #{tpu_custom_call.1}
  #allocation0 [shape = 'u32[]', space=smem, size = 0x4, offset = 0x4, fixed_abs, tag = 'smem constant byte address 0x4 - core index']
  #allocation1 [shape = 'u32[144,128]{1,0:T(1,128)}', space=vmem, size = 0x12000, scoped, tag = 'internal scratch']
  #allocation2 [shape = 'f32[1]{0:T(128)S(6)}', space=smem, size = 0x200, scoped, tag = 'scoped memory for tpu_custom_call.1']
  %s0 = inlined_call_operand.hbm [shape: f32[1,4,1], index: 0, kind: input, shape index: {}]
  %s1 = inlined_call_operand.<no memory space> [shape: f32[1], index: 1, kind: input, shape index: {}]
  %s2 = inlined_call_operand.hbm [shape: f32[2,4,256], index: 2, kind: input, shape index: {}]
  %s3 = inlined_call_operand.hbm [shape: f32[2,4,256], index: 3, kind: output, shape index: {}]
  %s4 = sld [smem:[#allocation0]]
  $region30: #{tpu_custom_call.1} parent=0
    _
  %s6 = ssub.s32 1, %s4
  %s7 = scalar_select 0, %s6, %s4
  %8 = sst [smem:[#allocation2]] %s1
  $region1: #{tpu_custom_call.1} parent=0
    #allocation3 [shape = 'u8[2048]{0}', space=vmem, size = 0x800, scoped, tag = 'input window, operand 0, single buffered']
    #allocation4 [shape = 's32[1]{0}', space=sflag, size = 0x4, scoped, tag = 'scoped memory for tpu_custom_call.1']
    #allocation5 [shape = 's32[1]{0}', space=sflag, size = 0x4, scoped, tag = 'scoped memory for tpu_custom_call.1']
    #allocation6 [shape = 'u8[8192]{0}', space=vmem, size = 0x2000, scoped, tag = 'input window, operand 2, single buffered']
    #allocation7 [shape = 's32[1]{0}', space=sflag, size = 0x4, scoped, tag = 'scoped memory for tpu_custom_call.1']
    #allocation8 [shape = 'u8[8192]{0}', space=vmem, size = 0x2000, scoped, tag = 'output window, operand 0, single buffered']
    %9 = vsyncpa [#allocation4], 0
    %10 = vsyncpa [#allocation7], 0
    %11 = vsyncpa [#allocation5], 0
    // Predicated region
    $region2: #{tpu_custom_call.1} parent=1 // pred_check
      _
    $region3: #{tpu_custom_call.1} parent=1 // pred_check_branch
      %13 = sbr.rel (0) target = $region5
    $region4: #{tpu_custom_call.1} parent=1 // pred_region
      %s15 = ssub.s32 64, 64
      %16 = vsyncadd [#allocation4], %s15
      %s18 = sshll.u32 [#allocation3], 4
      %s19 = int_to_ptr.vmem [resolvable:$true] %s18
      %21 = dma.hbm_to_vmem [thread:$0]  %s0, 64, %s19, [#allocation4]
    $region5: #{tpu_custom_call.1} parent=1 // pred_fallthru
      _
    // Predicated region
    $region6: #{tpu_custom_call.1} parent=1 // pred_check
      _
    $region7: #{tpu_custom_call.1} parent=1 // pred_check_branch
      %23 = sbr.rel (0) target = $region9
    $region8: #{tpu_custom_call.1} parent=1 // pred_region
      _
    $region9: #{tpu_custom_call.1} parent=1 // pred_fallthru
      _
    // Predicated region
    $region10: #{tpu_custom_call.1} parent=1 // pred_check
      _
    $region11: #{tpu_custom_call.1} parent=1 // pred_check_branch
      %25 = sbr.rel (0) target = $region13
    $region12: #{tpu_custom_call.1} parent=1 // pred_region
      %s27 = ssub.s32 256, 256
      %28 = vsyncadd [#allocation7], %s27
      %s29 = sshll.u32 [#allocation6], 4
      %s30 = int_to_ptr.vmem [resolvable:$true] %s29
      %35 = dma.hbm_to_vmem [thread:$0]  %s2, 256, %s30, [#allocation7], 128, 128, 8
    $region13: #{tpu_custom_call.1} parent=1 // pred_fallthru
      _
    // Predicated region
    $region14: #{tpu_custom_call.1} parent=1 // pred_check
      _
    $region15: #{tpu_custom_call.1} parent=1 // pred_check_branch
      %37 = sbr.rel (0) target = $region17
    $region16: #{tpu_custom_call.1} parent=1 // pred_region
      %38 = dma.done [#allocation4], 64
    $region17: #{tpu_custom_call.1} parent=1 // pred_fallthru
      _
    // Predicated region
    $region18: #{tpu_custom_call.1} parent=1 // pred_check
      _
    $region19: #{tpu_custom_call.1} parent=1 // pred_check_branch
      %40 = sbr.rel (0) target = $region21
    $region20: #{tpu_custom_call.1} parent=1 // pred_region
      %41 = dma.done [#allocation7], 256
    $region21: #{tpu_custom_call.1} parent=1 // pred_fallthru
      _
    %v42 = vld [vmem:[#allocation6] sm:$0xff]
    %v43 = vld [vmem:[#allocation6 + $0x8] sm:$0xff]
    %v44 = vld [vmem:[#allocation3] sm:$0xf]
    %46 = vset.pattern.permute.xlu0 0
    %47 = vperm.xlu0 %46, %v44
    %v48 = vpop.permute.xlu0 %47
    %v50 = vunpack.c.l.s4 839922192
    %v51 = vunpack.c.0.s8 %v50
    %v52 = vlaneseq
    %v53 = vshrl.u32 %v52, 7
    %v54 = vsub.s32 %v51, %v53
    %v55 = vrot.slane %v48, %v54
    %v57 = vmul.f32 %v42, %v55
    %v58 = vmul.f32 %v43, %v55
    %v61 = vcombine.high %v57, %v57
    %v62 = vcombine.high %v58, %v58
    %vm65 = vcmask 1043456
    %v66 = vsel %vm65, %v57, 0.0
    %v67 = vrot.slane %v66, 4
    %v68 = vadd.f32 %v66, %v67
    %v69 = vrot.slane %v68, 2
    %v70 = vadd.f32 %v68, %v69
    %v71 = vrot.slane %v70, 1
    %v72 = vadd.f32 %v70, %v71
    %v73 = vsel %vm65, %v61, 0.0
    %v74 = vrot.slane %v73, 4
    %v75 = vadd.f32 %v73, %v74
    %v76 = vrot.slane %v75, 2
    %v77 = vadd.f32 %v75, %v76
    %v78 = vrot.slane %v77, 1
    %v79 = vadd.f32 %v77, %v78
    %v80 = vsel %vm65, %v58, 0.0
    %v81 = vrot.slane %v80, 4
    %v82 = vadd.f32 %v80, %v81
    %v83 = vrot.slane %v82, 2
    %v84 = vadd.f32 %v82, %v83
    %v85 = vrot.slane %v84, 1
    %v86 = vadd.f32 %v84, %v85
    %v87 = vsel %vm65, %v62, 0.0
    %v88 = vrot.slane %v87, 4
    %v89 = vadd.f32 %v87, %v88
    %v90 = vrot.slane %v89, 2
    %v91 = vadd.f32 %v89, %v90
    %v92 = vrot.slane %v91, 1
    %v93 = vadd.f32 %v91, %v92
    %s94 = sld [smem:[#allocation2]]
    %v95 = vstv %s94
    %v96 = vadd.f32 %v72, %v95
    %v97 = vadd.f32 %v79, %v95
    %v98 = vadd.f32 %v86, %v95
    %v99 = vadd.f32 %v93, %v95
    %v100 = vxor.u32 %v96, 2147483648
    %v101 = vxor.u32 %v97, 2147483648
    %v102 = vxor.u32 %v98, 2147483648
    %v103 = vxor.u32 %v99, 2147483648
    %v104 = vmul.f32 %v100, 1.442695
    %v105 = vpow.pop %v104
    %v106 = vmul.f32 %v101, 1.442695
    %v107 = vpow.pop %v106
    %v108 = vmul.f32 %v102, 1.442695
    %v109 = vpow.pop %v108
    %v110 = vmul.f32 %v103, 1.442695
    %v111 = vpow.pop %v110
    %v112 = vadd.f32 %v105, 1.0
    %v113 = vadd.f32 %v107, 1.0
    %v114 = vadd.f32 %v109, 1.0
    %v115 = vadd.f32 %v111, 1.0
    %v116 = vrcp.pop %v112
    %v117 = vmul.f32 1.0, %v116
    %v118 = vrcp.pop %v113
    %v119 = vmul.f32 1.0, %v118
    %v120 = vrcp.pop %v114
    %v121 = vmul.f32 1.0, %v120
    %v122 = vrcp.pop %v115
    %v123 = vmul.f32 1.0, %v122
    %v128 = vcombine.low %v117, %v119
    %v129 = vcombine.low %v121, %v123
    %v132 = vmul.f32 %v42, %v128
    %v133 = vmul.f32 %v43, %v129
    %134 = vst [vmem:[#allocation8] sm:$0xff] %v132
    %135 = vst [vmem:[#allocation8 + $0x8] sm:$0xff] %v133
    // Predicated region
    $region22: #{tpu_custom_call.1} parent=1 // pred_check
      _
    $region23: #{tpu_custom_call.1} parent=1 // pred_check_branch
      %137 = sbr.rel (0) target = $region25
    $region24: #{tpu_custom_call.1} parent=1 // pred_region
      %s139 = ssub.s32 256, 256
      %140 = vsyncadd [#allocation5], %s139
      %s141 = sshll.u32 [#allocation8], 4
      %s142 = int_to_ptr.vmem [resolvable:$true] %s141
      %147 = dma.vmem_to_hbm [thread:$0]  %s142, 256, %s3, [#allocation5], 128, 128, 8
    $region25: #{tpu_custom_call.1} parent=1 // pred_fallthru
      _
    // Predicated region
    $region26: #{tpu_custom_call.1} parent=1 // pred_check
      _
    $region27: #{tpu_custom_call.1} parent=1 // pred_check_branch
      %149 = sbr.rel (0) target = $region29
    $region28: #{tpu_custom_call.1} parent=1 // pred_region
      %150 = dma.done [#allocation5], 256
    $region29: #{tpu_custom_call.1} parent=1 // pred_fallthru
      _
    %151 = vsyncpa [#allocation4], 1
    %152 = vsyncpa [#allocation7], 1
    %153 = vsyncpa [#allocation5], 1

</llo_original>
